<compile_context>
chip_gen: v6e
topology: v6e:2x2x1
jax: 0.10.0
libtpu: 0.0.40
codegen_flags: <defaults>
</compile_context>

<pallas_src>
import jax
import jax.numpy as jnp
from jax.experimental import pallas as pl
from jax.experimental.pallas import tpu as pltpu


def add_one_kernel(x_ref, o_ref):
    # Pure streaming vld / vadd / vst.
    o_ref[...] = x_ref[...] + jnp.asarray(1, dtype=o_ref.dtype)


def _round_up(n: int, m: int) -> int:
    return ((n + m - 1) // m) * m


_SMALL_BYTES = 256 * 1024          # single-block fast-path threshold
_TARGET_BLOCK_BYTES = 4 * 1024 * 1024


def _cost(total: int, itemsize: int) -> pl.CostEstimate:
    return pl.CostEstimate(
        flops=total, transcendentals=0, bytes_accessed=2 * total * itemsize
    )


def _single_block_add_one(x):
    """Whole array as one VMEM block (full-dims exception), grid=()."""
    total = x.size
    itemsize = x.dtype.itemsize
    # Lane-friendly 2D view when possible; tiny anyway.
    if total % 128 == 0:
        view = x.reshape(total // 128, 128)
    else:
        view = x.reshape(1, total)
    out = pl.pallas_call(
        add_one_kernel,
        out_shape=jax.ShapeDtypeStruct(view.shape, x.dtype),
        cost_estimate=_cost(total, itemsize),
    )(view)
    return out.reshape(x.shape)


def add_one(x):
    """Pallas implementation of Model.forward: x + 1, any shape/dtype."""
    orig_shape = x.shape
    dtype = x.dtype
    total = x.size
    itemsize = dtype.itemsize

    if total == 0:
        return x

    # Small-input fast path: no tiling, no padding, no extra HBM passes.
    if total * itemsize <= _SMALL_BYTES:
        return _single_block_add_one(x)

    flat = x.reshape(-1)

    # Lane-dense column width that divides the element count (no padding).
    cols = None
    for c in (1024, 512, 256, 128):
        if total % c == 0:
            cols = c
            break

    if cols is None:
        # Rare: total not a multiple of 128. Process the 128-aligned bulk with
        # the tiled kernel and the (<128-element) tail with a tiny single-block
        # kernel; no full-array pad/slice passes.
        main_total = (total // 128) * 128
        head = add_one(flat[:main_total])
        tail = add_one(flat[main_total:])
        return jnp.concatenate([head, tail]).reshape(orig_shape)

    rows = total // cols

    # dtype-adaptive sublane multiple: 8 (f32) / 16 (bf16) / 32 (int8/fp8).
    sublane_mult = max(8, 32 // itemsize)

    # ~4 MiB blocks regardless of dtype.
    block_rows = max(sublane_mult, _TARGET_BLOCK_BYTES // (cols * itemsize))
    block_rows = _round_up(block_rows, sublane_mult)
    # v7x megacore: guarantee >= 2 grid steps when there is enough work,
    # so both TensorCores (and their DMA streams) are busy.
    half_rows = _round_up(pl.cdiv(rows, 2), sublane_mult)
    block_rows = max(sublane_mult, min(block_rows, half_rows))

    grid = (pl.cdiv(rows, block_rows),)  # edge block masked by Pallas
    x2 = flat.reshape(rows, cols)        # contiguous reshape: free

    out = pl.pallas_call(
        add_one_kernel,
        out_shape=jax.ShapeDtypeStruct((rows, cols), dtype),
        grid=grid,
        in_specs=[pl.BlockSpec((block_rows, cols), lambda i: (i, 0))],
        out_specs=pl.BlockSpec((block_rows, cols), lambda i: (i, 0)),
        compiler_params=pltpu.CompilerParams(
            dimension_semantics=("parallel",),
            # <= 4 MiB block, double-buffered in+out = <= 16 MiB: safe on
            # v5e / v6e (128 MiB) and v7x (64 MiB physical VMEM).
            vmem_limit_bytes=32 * 1024 * 1024,
        ),
        cost_estimate=_cost(total, itemsize),
    )(x2)

    return out.reshape(orig_shape)


if __name__ == "__main__":
    key = jax.random.PRNGKey(0)
    # Small shape consistent with a generic tensor input: (2, 4, 16, 16)
    x = jax.random.normal(key, (2, 4, 16, 16), dtype=jnp.float32)

    y = add_one(x)
    y = jax.block_until_ready(y)

    expected = x + 1.0
    assert y.shape == x.shape and y.dtype == x.dtype
    assert jnp.allclose(y, expected), "mismatch vs reference"

    # Exercise the tiled (large-input) path too, including a non-divisible
    # row count so the edge-block masking is covered.
    x_big = jax.random.normal(jax.random.PRNGKey(1), (600, 1024), dtype=jnp.float32)
    y_big = jax.block_until_ready(add_one(x_big))
    assert jnp.allclose(y_big, x_big + 1.0), "mismatch vs reference (large)"

    print("KERNEL_OK")
</pallas_src>

<mosaic_0001>
module attributes {stable_mosaic.version = 11 : i64} {
  func.func @add_one_kernel(%arg0: memref<16x128xf32, #tpu.memory_space<vmem>>, %arg1: memref<16x128xf32, #tpu.memory_space<vmem>>) attributes {dimension_semantics = [], scalar_prefetch = 0 : i64, scratch_operands = 0 : i64, tpu.core_type = #tpu.core_type<tc>} {
    %c0 = arith.constant 0 : index
    %c0_0 = arith.constant 0 : index
    %0 = vector.load %arg0[%c0, %c0_0] : memref<16x128xf32, #tpu.memory_space<vmem>>, vector<16x128xf32>
    %cst = arith.constant 1.000000e+00 : f32
    %1 = vector.broadcast %cst : f32 to vector<16x128xf32>
    %2 = arith.addf %0, %1 : vector<16x128xf32>
    %c0_1 = arith.constant 0 : index
    %c0_2 = arith.constant 0 : index
    %3 = vector.load %arg1[%c0_1, %c0_2] : memref<16x128xf32, #tpu.memory_space<vmem>>, vector<16x128xf32>
    tpu.vector_store %arg1[%c0_1, %c0_2], %2 {strides = array<i32>} : memref<16x128xf32, #tpu.memory_space<vmem>>, vector<16x128xf32>,
    return
  }
}

</mosaic_0001>

<llo_original>
// kernel: tpu_custom_call.1
$region0: #{tpu_custom_call.1}
  #allocation0 [shape = 'u32[]', space=smem, size = 0x4, offset = 0x4, fixed_abs, tag = 'smem constant byte address 0x4 - core index']
  #allocation1 [shape = 'u32[144,128]{1,0:T(1,128)}', space=vmem, size = 0x12000, scoped, tag = 'internal scratch']
  %s0 = inlined_call_operand.hbm [shape: f32[16,128], index: 0, kind: input, shape index: {}]
  %s1 = inlined_call_operand.hbm [shape: f32[16,128], index: 1, kind: output, shape index: {}]
  %s2 = sld [smem:[#allocation0]]
  $region18: #{tpu_custom_call.1} parent=0
    _
  %s4 = ssub.s32 1, %s2
  %s5 = scalar_select 0, %s4, %s2
  $region1: #{tpu_custom_call.1} parent=0
    #allocation2 [shape = 'u8[8192]{0}', space=vmem, size = 0x2000, scoped, tag = 'input window, operand 0, single buffered']
    #allocation3 [shape = 's32[1]{0}', space=sflag, size = 0x4, scoped, tag = 'scoped memory for tpu_custom_call.1']
    #allocation4 [shape = 's32[1]{0}', space=sflag, size = 0x4, scoped, tag = 'scoped memory for tpu_custom_call.1']
    #allocation5 [shape = 'u8[8192]{0}', space=vmem, size = 0x2000, scoped, tag = 'output window, operand 0, single buffered']
    %6 = vsyncpa [#allocation3], 0
    %7 = vsyncpa [#allocation4], 0
    // Predicated region
    $region2: #{tpu_custom_call.1} parent=1 // pred_check
      _
    $region3: #{tpu_custom_call.1} parent=1 // pred_check_branch
      %9 = sbr.rel (0) target = $region5
    $region4: #{tpu_custom_call.1} parent=1 // pred_region
      %s11 = ssub.s32 256, 256
      %12 = vsyncadd [#allocation3], %s11
      %s13 = sshll.u32 [#allocation2], 4
      %s14 = int_to_ptr.vmem [resolvable:$true] %s13
      %19 = dma.hbm_to_vmem [thread:$0]  %s0, 256, %s14, [#allocation3], 128, 128, 8
    $region5: #{tpu_custom_call.1} parent=1 // pred_fallthru
      _
    // Predicated region
    $region6: #{tpu_custom_call.1} parent=1 // pred_check
      _
    $region7: #{tpu_custom_call.1} parent=1 // pred_check_branch
      %21 = sbr.rel (0) target = $region9
    $region8: #{tpu_custom_call.1} parent=1 // pred_region
      %22 = dma.done [#allocation3], 256
    $region9: #{tpu_custom_call.1} parent=1 // pred_fallthru
      _
    %v23 = vld [vmem:[#allocation2] sm:$0xff]
    %v24 = vld [vmem:[#allocation2 + $0x8] sm:$0xff]
    %v25 = vadd.f32 %v23, 1.0
    %v26 = vadd.f32 %v24, 1.0
    %27 = vst [vmem:[#allocation5] sm:$0xff] %v25
    %28 = vst [vmem:[#allocation5 + $0x8] sm:$0xff] %v26
    // Predicated region
    $region10: #{tpu_custom_call.1} parent=1 // pred_check
      _
    $region11: #{tpu_custom_call.1} parent=1 // pred_check_branch
      %30 = sbr.rel (0) target = $region13
    $region12: #{tpu_custom_call.1} parent=1 // pred_region
      %s32 = ssub.s32 256, 256
      %33 = vsyncadd [#allocation4], %s32
      %s34 = sshll.u32 [#allocation5], 4
      %s35 = int_to_ptr.vmem [resolvable:$true] %s34
      %40 = dma.vmem_to_hbm [thread:$0]  %s35, 256, %s1, [#allocation4], 128, 128, 8
    $region13: #{tpu_custom_call.1} parent=1 // pred_fallthru
      _
    // Predicated region
    $region14: #{tpu_custom_call.1} parent=1 // pred_check
      _
    $region15: #{tpu_custom_call.1} parent=1 // pred_check_branch
      %42 = sbr.rel (0) target = $region17
    $region16: #{tpu_custom_call.1} parent=1 // pred_region
      %43 = dma.done [#allocation4], 256
    $region17: #{tpu_custom_call.1} parent=1 // pred_fallthru
      _
    %44 = vsyncpa [#allocation3], 1
    %45 = vsyncpa [#allocation4], 1

</llo_original>
